<compile_context>
chip_gen: v7x
topology: tpu7x:2x2x1
jax: 0.10.0
libtpu: 0.0.40
codegen_flags: <defaults>
</compile_context>

<pallas_src>
import functools

import jax
import jax.numpy as jnp
from jax import lax
from jax.experimental import pallas as pl
from jax.experimental.pallas import tpu as pltpu


# ---------------------------------------------------------------------------
# Fused kernel: conv1 + ReLU + conv2 + ReLU + residual (+1x1 downsample) + ReLU
# ---------------------------------------------------------------------------
def _temporal_block_kernel(*refs, dilation, pad, has_downsample):
    """One (batch, L-tile) grid step of the whole TemporalBlock.

    refs (has_downsample=True):
        x_ref, w1_ref, b1_ref, w2_ref, b2_ref, wd_ref, bd_ref, o_ref, xw, hw
    refs (has_downsample=False):
        x_ref, w1_ref, b1_ref, w2_ref, b2_ref, o_ref, xw, hw

    x_ref : (1, C_in, L_tile)         current input tile
    w*_ref: (K, C_out, C_*)           tap-major weights (each tap = MXU matmul)
    b*_ref: (C_out, 1)
    o_ref : (1, C_out, L_tile)        lane-dense output tile
    xw    : VMEM (C_in,  pad+L_tile)  [halo | x tile]  (halo = causal left pad)
    hw    : VMEM (C_out, pad+L_tile)  [halo | h1 tile] in f32
    """
    if has_downsample:
        (x_ref, w1_ref, b1_ref, w2_ref, b2_ref, wd_ref, bd_ref,
         o_ref, xw_ref, hw_ref) = refs
    else:
        (x_ref, w1_ref, b1_ref, w2_ref, b2_ref,
         o_ref, xw_ref, hw_ref) = refs

    k_taps = w1_ref.shape[0]
    l_tile = o_ref.shape[2]
    t = pl.program_id(1)

    # ---- causal left padding: zero the halo at the start of each sequence --
    if pad > 0:
        @pl.when(t == 0)
        def _init_halo():
            xw_ref[:, pl.ds(0, pad)] = jnp.zeros((xw_ref.shape[0], pad),
                                                 xw_ref.dtype)
            hw_ref[:, pl.ds(0, pad)] = jnp.zeros((hw_ref.shape[0], pad),
                                                 hw_ref.dtype)

    x_tile = x_ref[0]                                   # (C_in, L_tile)
    xw_ref[:, pl.ds(pad, l_tile)] = x_tile

    # ---- layer 1: causal dilated conv + bias + ReLU (stays in VMEM) --------
    xv = xw_ref[...]                                    # load window once
    acc = jnp.dot(w1_ref[0], xv[:, 0:l_tile],
                  preferred_element_type=jnp.float32)
    for k in range(1, k_taps):                          # static, tiny K
        acc += jnp.dot(w1_ref[k],
                       xv[:, k * dilation:k * dilation + l_tile],
                       preferred_element_type=jnp.float32)
    h1 = jnp.maximum(acc + b1_ref[...], 0.0)            # (C_out, L_tile) f32
    hw_ref[:, pl.ds(pad, l_tile)] = h1

    # ---- layer 2: causal dilated conv + bias + ReLU -------------------------
    hv = hw_ref[...]
    acc2 = jnp.dot(w2_ref[0], hv[:, 0:l_tile],
                   preferred_element_type=jnp.float32)
    for k in range(1, k_taps):
        acc2 += jnp.dot(w2_ref[k],
                        hv[:, k * dilation:k * dilation + l_tile],
                        preferred_element_type=jnp.float32)
    h2 = jnp.maximum(acc2 + b2_ref[...], 0.0)

    # ---- residual (optional 1x1 downsample) + final ReLU --------------------
    if has_downsample:
        res = jnp.dot(wd_ref[...], x_tile,
                      preferred_element_type=jnp.float32) + bd_ref[...]
    else:
        res = x_tile.astype(jnp.float32)
    o_ref[0] = jnp.maximum(h2 + res, 0.0).astype(o_ref.dtype)

    # ---- carry the pad-sized halo of x and h1 to the next L tile ------------
    if pad > 0:
        @pl.when(t + 1 < pl.num_programs(1))
        def _carry_halo():
            xw_ref[:, pl.ds(0, pad)] = x_tile[:, l_tile - pad:]
            hw_ref[:, pl.ds(0, pad)] = h1[:, l_tile - pad:]


# ---------------------------------------------------------------------------
# Wrapper
# ---------------------------------------------------------------------------
def _weight_norm(v, g):
    """PyTorch weight_norm (dim=0): w = g * v / ||v||, per-output-channel."""
    norm = jnp.sqrt(jnp.sum(v * v, axis=(1, 2), keepdims=True))
    return (g.reshape(-1, 1, 1) / norm) * v


def _choose_l_tile(seq_len, pad, c_in, c_out, itemsize, max_l_tile=None):
    """Largest L tile (multiple of 128, divisor of L, >= pad) within budget."""
    cap = max_l_tile if max_l_tile is not None else 2048
    if seq_len <= cap or seq_len % 128 != 0:
        return seq_len
    budget = 12 * 1024 * 1024       # conservative so double-buffering fits v7x
    best = seq_len
    t = 128
    while t <= min(seq_len, cap):
        if seq_len % t == 0 and t >= pad:
            need = ((c_in + c_out) * itemsize * t * 2
                    + (c_in * itemsize + c_out * 4) * (pad + t))
            if need <= budget:
                best = t
        t += 128
    return best


def temporal_block_forward(x, params, *, kernel_size, stride, dilation,
                           padding, max_l_tile=None):
    """Forward pass of TemporalBlock (inference mode), fully fused."""
    # TODO(synk): train-mode Dropout omitted — inference treats Dropout as identity.
    assert stride == 1, "TCN TemporalBlock uses stride=1"
    assert padding == (kernel_size - 1) * dilation, (
        "chomp fusion assumes the standard TCN causal padding (k-1)*dilation")

    n, c_in, seq_len = x.shape
    w1 = _weight_norm(params["v1"], params["g1"])      # (C_out, C_in, K)
    w2 = _weight_norm(params["v2"], params["g2"])      # (C_out, C_out, K)
    c_out = w1.shape[0]
    pad = padding
    itemsize = x.dtype.itemsize

    # Tap-major layout: w_t[k] is a clean (C_out, C_*) MXU operand.
    w1_t = jnp.transpose(w1, (2, 0, 1))
    w2_t = jnp.transpose(w2, (2, 0, 1))
    b1 = params["b1"].reshape(c_out, 1)
    b2 = params["b2"].reshape(c_out, 1)

    l_tile = _choose_l_tile(seq_len, pad, c_in, c_out, itemsize, max_l_tile)
    assert seq_len % l_tile == 0
    num_t = seq_len // l_tile
    if num_t > 1:
        assert l_tile >= pad, "halo carry requires L_tile >= causal padding"

    # Explicit VMEM budget: double-buffered I/O blocks + weights + scratches.
    block_bytes = (c_in + c_out) * l_tile * itemsize * 2
    w_bytes = 2 * itemsize * (kernel_size * c_out * (c_in + c_out)
                              + c_out * (c_in + 3))
    scr_bytes = c_in * itemsize * (pad + l_tile) + c_out * 4 * (pad + l_tile)
    vmem_limit = int(min(max(2 * (block_bytes + w_bytes + scr_bytes) + (2 << 20),
                             16 << 20), 64 << 20))

    compiler_params = pltpu.CompilerParams(
        dimension_semantics=("parallel", "arbitrary"),
        vmem_limit_bytes=vmem_limit)

    has_downsample = "wd" in params
    in_specs = [
        pl.BlockSpec((1, c_in, l_tile), lambda b, t: (b, 0, t)),
        pl.BlockSpec((kernel_size, c_out, c_in), lambda b, t: (0, 0, 0)),
        pl.BlockSpec((c_out, 1), lambda b, t: (0, 0)),
        pl.BlockSpec((kernel_size, c_out, c_out), lambda b, t: (0, 0, 0)),
        pl.BlockSpec((c_out, 1), lambda b, t: (0, 0)),
    ]
    operands = [x, w1_t, b1, w2_t, b2]
    if has_downsample:
        in_specs += [
            pl.BlockSpec((c_out, c_in), lambda b, t: (0, 0)),
            pl.BlockSpec((c_out, 1), lambda b, t: (0, 0)),
        ]
        operands += [
            params["wd"].reshape(c_out, c_in),
            params["bd"].reshape(c_out, 1),
        ]

    out = pl.pallas_call(
        functools.partial(
            _temporal_block_kernel,
            dilation=dilation,
            pad=pad,
            has_downsample=has_downsample,
        ),
        out_shape=jax.ShapeDtypeStruct((n, c_out, seq_len), x.dtype),
        grid_spec=pltpu.PrefetchScalarGridSpec(
            num_scalar_prefetch=0,
            grid=(n, num_t),
            in_specs=in_specs,
            out_specs=pl.BlockSpec((1, c_out, l_tile), lambda b, t: (b, 0, t)),
            scratch_shapes=[
                pltpu.VMEM((c_in, pad + l_tile), x.dtype),      # x halo window
                pltpu.VMEM((c_out, pad + l_tile), jnp.float32),  # h1 halo window
            ],
        ),
        compiler_params=compiler_params,
    )(*operands)
    return out


# ---------------------------------------------------------------------------
# Pure-JAX reference (mirrors the PyTorch module op-for-op)
# ---------------------------------------------------------------------------
def _conv1d_ref(x, w, b, dilation, padding):
    y = lax.conv_general_dilated(
        x, w,
        window_strides=(1,),
        padding=[(padding, padding)],
        rhs_dilation=(dilation,),
        dimension_numbers=("NCH", "OIH", "NCH"),
        precision=lax.Precision.HIGHEST,
    )
    return y + b.reshape(1, -1, 1)


def temporal_block_ref(x, params, *, kernel_size, dilation, padding):
    w1 = _weight_norm(params["v1"], params["g1"])
    w2 = _weight_norm(params["v2"], params["g2"])
    out = _conv1d_ref(x, w1, params["b1"], dilation, padding)
    if padding > 0:
        out = out[:, :, :-padding]               # Chomp1d
    out = jnp.maximum(out, 0.0)                  # ReLU (Dropout = identity)
    out = _conv1d_ref(out, w2, params["b2"], dilation, padding)
    if padding > 0:
        out = out[:, :, :-padding]               # Chomp1d
    out = jnp.maximum(out, 0.0)
    res = _conv1d_ref(x, params["wd"], params["bd"], 1, 0) if "wd" in params else x
    return jnp.maximum(out + res, 0.0)


# ---------------------------------------------------------------------------
if __name__ == "__main__":
    key = jax.random.PRNGKey(0)

    def make_params(pkey, c_in, c_out, k, downsample):
        keys = jax.random.split(pkey, 8)
        p = {
            "v1": 0.01 * jax.random.normal(keys[0], (c_out, c_in, k), jnp.float32),
            "g1": 1.0 + 0.1 * jax.random.normal(keys[1], (c_out,), jnp.float32),
            "b1": 0.1 * jax.random.normal(keys[2], (c_out,), jnp.float32),
            "v2": 0.01 * jax.random.normal(keys[3], (c_out, c_out, k), jnp.float32),
            "g2": 1.0 + 0.1 * jax.random.normal(keys[4], (c_out,), jnp.float32),
            "b2": 0.1 * jax.random.normal(keys[5], (c_out,), jnp.float32),
        }
        if downsample:
            p["wd"] = 0.01 * jax.random.normal(keys[6], (c_out, c_in, 1), jnp.float32)
            p["bd"] = 0.1 * jax.random.normal(keys[7], (c_out,), jnp.float32)
        return p

    N = 2
    configs = [
        # (n_inputs, n_outputs, kernel_size, dilation, seq_len, max_l_tile)
        (4, 8, 3, 1, 16, None),     # 1x1-conv downsample residual path
        (8, 8, 3, 2, 16, None),     # identity residual path, dilated conv
        (8, 16, 3, 2, 256, 128),    # multi-L-tile path (exercises halo carry)
    ]
    for idx, (c_in, c_out, k, dil, L, max_lt) in enumerate(configs):
        pkey, xkey, key = jax.random.split(key, 3)
        padding = (k - 1) * dil
        params = make_params(pkey, c_in, c_out, k, downsample=(c_in != c_out))
        x = jax.random.normal(xkey, (N, c_in, L), jnp.float32)

        y = temporal_block_forward(
            x, params, kernel_size=k, stride=1, dilation=dil, padding=padding,
            max_l_tile=max_lt)
        y = jax.block_until_ready(y)

        y_ref = temporal_block_ref(
            x, params, kernel_size=k, dilation=dil, padding=padding)
        assert y.shape == (N, c_out, L), y.shape
        assert jnp.allclose(y, y_ref, atol=1e-4, rtol=1e-4), (
            f"config {idx}: max err {jnp.max(jnp.abs(y - y_ref))}")

    print("KERNEL_OK")
</pallas_src>

<mosaic_0001>
module attributes {stable_mosaic.version = 11 : i64} {
  func.func @_temporal_block_kernel(%arg0: i32, %arg1: i32, %arg2: memref<1x4x16xf32, #tpu.memory_space<vmem>>, %arg3: memref<3x8x4xf32, #tpu.memory_space<vmem>>, %arg4: memref<8x1xf32, #tpu.memory_space<vmem>>, %arg5: memref<3x8x8xf32, #tpu.memory_space<vmem>>, %arg6: memref<8x1xf32, #tpu.memory_space<vmem>>, %arg7: memref<8x4xf32, #tpu.memory_space<vmem>>, %arg8: memref<8x1xf32, #tpu.memory_space<vmem>>, %arg9: memref<1x8x16xf32, #tpu.memory_space<vmem>>, %arg10: memref<4x18xf32, #tpu.memory_space<vmem>>, %arg11: memref<8x18xf32, #tpu.memory_space<vmem>>) attributes {dimension_semantics = [#tpu.dimension_semantics<parallel>, #tpu.dimension_semantics<arbitrary>], iteration_bounds = array<i64: 2, 1>, scalar_prefetch = 0 : i64, scratch_operands = 2 : i64, tpu.core_type = #tpu.core_type<tc>, window_params = [{transform_indices = @transform_0, window_bounds = array<i64: 1, 4, 16>}, {pipeline_mode = #tpu.pipeline_mode<synchronous>, transform_indices = @transform_1, window_bounds = array<i64: 3, 8, 4>}, {pipeline_mode = #tpu.pipeline_mode<synchronous>, transform_indices = @transform_2, window_bounds = array<i64: 8, 1>}, {pipeline_mode = #tpu.pipeline_mode<synchronous>, transform_indices = @transform_3, window_bounds = array<i64: 3, 8, 8>}, {pipeline_mode = #tpu.pipeline_mode<synchronous>, transform_indices = @transform_4, window_bounds = array<i64: 8, 1>}, {pipeline_mode = #tpu.pipeline_mode<synchronous>, transform_indices = @transform_5, window_bounds = array<i64: 8, 4>}, {pipeline_mode = #tpu.pipeline_mode<synchronous>, transform_indices = @transform_6, window_bounds = array<i64: 8, 1>}, {transform_indices = @transform_7, window_bounds = array<i64: 1, 8, 16>}]} {
    %c0_i32 = arith.constant 0 : i32
    %0 = arith.cmpi eq, %arg1, %c0_i32 : i32
    %1 = arith.extui %0 : i1 to i32
    %c0_i32_0 = arith.constant 0 : i32
    %2 = arith.cmpi ne, %1, %c0_i32_0 : i32
    scf.if %2 {
      %cst_49 = arith.constant 0.000000e+00 : f32
      %62 = vector.broadcast %cst_49 : f32 to vector<4x2xf32>
      %c0_50 = arith.constant 0 : index
      %c0_51 = arith.constant 0 : index
      %63 = vector.load %arg10[%c0_50, %c0_51] : memref<4x18xf32, #tpu.memory_space<vmem>>, vector<4x2xf32>
      tpu.vector_store %arg10[%c0_50, %c0_51], %62 {strides = array<i32>} : memref<4x18xf32, #tpu.memory_space<vmem>>, vector<4x2xf32>,
      %cst_52 = arith.constant 0.000000e+00 : f32
      %64 = vector.broadcast %cst_52 : f32 to vector<8x2xf32>
      %c0_53 = arith.constant 0 : index
      %c0_54 = arith.constant 0 : index
      %65 = vector.load %arg11[%c0_53, %c0_54] : memref<8x18xf32, #tpu.memory_space<vmem>>, vector<8x2xf32>
      tpu.vector_store %arg11[%c0_53, %c0_54], %64 {strides = array<i32>} : memref<8x18xf32, #tpu.memory_space<vmem>>, vector<8x2xf32>,
    } else {
    }
    %c0 = arith.constant 0 : index
    %c0_1 = arith.constant 0 : index
    %c0_2 = arith.constant 0 : index
    %3 = vector.load %arg2[%c0, %c0_1, %c0_2] : memref<1x4x16xf32, #tpu.memory_space<vmem>>, vector<1x4x16xf32>
    %4 = vector.shape_cast %3 : vector<1x4x16xf32> to vector<4x16xf32>
    %c0_3 = arith.constant 0 : index
    %c2 = arith.constant 2 : index
    %5 = vector.load %arg10[%c0_3, %c2] : memref<4x18xf32, #tpu.memory_space<vmem>>, vector<4x16xf32>
    tpu.vector_store %arg10[%c0_3, %c2], %4 {strides = array<i32>} : memref<4x18xf32, #tpu.memory_space<vmem>>, vector<4x16xf32>,
    %c0_4 = arith.constant 0 : index
    %c0_5 = arith.constant 0 : index
    %6 = vector.load %arg10[%c0_4, %c0_5] : memref<4x18xf32, #tpu.memory_space<vmem>>, vector<4x18xf32>
    %c0_6 = arith.constant 0 : index
    %c0_7 = arith.constant 0 : index
    %c0_8 = arith.constant 0 : index
    %7 = vector.load %arg3[%c0_6, %c0_7, %c0_8] : memref<3x8x4xf32, #tpu.memory_space<vmem>>, vector<1x8x4xf32>
    %8 = vector.shape_cast %7 : vector<1x8x4xf32> to vector<8x4xf32>
    %9 = vector.extract_strided_slice %6 {offsets = [0, 0], sizes = [4, 16], strides = [1, 1]} : vector<4x18xf32> to vector<4x16xf32>
    %cst = arith.constant dense<0.000000e+00> : vector<8x16xf32>
    %10 = tpu.matmul %8, %9, %cst {dimension_numbers = #tpu.dot_dimension_numbers<[1], [0], [0], [1], [0, 0, 1, 1], [], []>} : vector<8x4xf32>, vector<4x16xf32>, vector<8x16xf32> -> vector<8x16xf32>
    %c1 = arith.constant 1 : index
    %c0_9 = arith.constant 0 : index
    %c0_10 = arith.constant 0 : index
    %11 = vector.load %arg3[%c1, %c0_9, %c0_10] : memref<3x8x4xf32, #tpu.memory_space<vmem>>, vector<1x8x4xf32>
    %12 = vector.shape_cast %11 : vector<1x8x4xf32> to vector<8x4xf32>
    %13 = vector.extract_strided_slice %6 {offsets = [0, 1], sizes = [4, 16], strides = [1, 1]} : vector<4x18xf32> to vector<4x16xf32>
    %cst_11 = arith.constant dense<0.000000e+00> : vector<8x16xf32>
    %14 = tpu.matmul %12, %13, %cst_11 {dimension_numbers = #tpu.dot_dimension_numbers<[1], [0], [0], [1], [0, 0, 1, 1], [], []>} : vector<8x4xf32>, vector<4x16xf32>, vector<8x16xf32> -> vector<8x16xf32>
    %15 = arith.addf %10, %14 : vector<8x16xf32>
    %c2_12 = arith.constant 2 : index
    %c0_13 = arith.constant 0 : index
    %c0_14 = arith.constant 0 : index
    %16 = vector.load %arg3[%c2_12, %c0_13, %c0_14] : memref<3x8x4xf32, #tpu.memory_space<vmem>>, vector<1x8x4xf32>
    %17 = vector.shape_cast %16 : vector<1x8x4xf32> to vector<8x4xf32>
    %18 = vector.extract_strided_slice %6 {offsets = [0, 2], sizes = [4, 16], strides = [1, 1]} : vector<4x18xf32> to vector<4x16xf32>
    %cst_15 = arith.constant dense<0.000000e+00> : vector<8x16xf32>
    %19 = tpu.matmul %17, %18, %cst_15 {dimension_numbers = #tpu.dot_dimension_numbers<[1], [0], [0], [1], [0, 0, 1, 1], [], []>} : vector<8x4xf32>, vector<4x16xf32>, vector<8x16xf32> -> vector<8x16xf32>
    %20 = arith.addf %15, %19 : vector<8x16xf32>
    %c0_16 = arith.constant 0 : index
    %c0_17 = arith.constant 0 : index
    %21 = vector.load %arg4[%c0_16, %c0_17] : memref<8x1xf32, #tpu.memory_space<vmem>>, vector<8x1xf32>
    %22 = vector.broadcast %21 : vector<8x1xf32> to vector<8x16xf32>
    %23 = arith.addf %20, %22 : vector<8x16xf32>
    %cst_18 = arith.constant 0.000000e+00 : f32
    %24 = vector.broadcast %cst_18 : f32 to vector<8x16xf32>
    %25 = arith.maximumf %23, %24 : vector<8x16xf32>
    %c0_19 = arith.constant 0 : index
    %c2_20 = arith.constant 2 : index
    %26 = vector.load %arg11[%c0_19, %c2_20] : memref<8x18xf32, #tpu.memory_space<vmem>>, vector<8x16xf32>
    tpu.vector_store %arg11[%c0_19, %c2_20], %25 {strides = array<i32>} : memref<8x18xf32, #tpu.memory_space<vmem>>, vector<8x16xf32>,
    %c0_21 = arith.constant 0 : index
    %c0_22 = arith.constant 0 : index
    %27 = vector.load %arg11[%c0_21, %c0_22] : memref<8x18xf32, #tpu.memory_space<vmem>>, vector<8x18xf32>
    %c0_23 = arith.constant 0 : index
    %c0_24 = arith.constant 0 : index
    %c0_25 = arith.constant 0 : index
    %28 = vector.load %arg5[%c0_23, %c0_24, %c0_25] : memref<3x8x8xf32, #tpu.memory_space<vmem>>, vector<1x8x8xf32>
    %29 = vector.shape_cast %28 : vector<1x8x8xf32> to vector<8x8xf32>
    %30 = vector.extract_strided_slice %27 {offsets = [0, 0], sizes = [8, 16], strides = [1, 1]} : vector<8x18xf32> to vector<8x16xf32>
    %cst_26 = arith.constant dense<0.000000e+00> : vector<8x16xf32>
    %31 = tpu.matmul %29, %30, %cst_26 {dimension_numbers = #tpu.dot_dimension_numbers<[1], [0], [0], [1], [0, 0, 1, 1], [], []>} : vector<8x8xf32>, vector<8x16xf32>, vector<8x16xf32> -> vector<8x16xf32>
    %c1_27 = arith.constant 1 : index
    %c0_28 = arith.constant 0 : index
    %c0_29 = arith.constant 0 : index
    %32 = vector.load %arg5[%c1_27, %c0_28, %c0_29] : memref<3x8x8xf32, #tpu.memory_space<vmem>>, vector<1x8x8xf32>
    %33 = vector.shape_cast %32 : vector<1x8x8xf32> to vector<8x8xf32>
    %34 = vector.extract_strided_slice %27 {offsets = [0, 1], sizes = [8, 16], strides = [1, 1]} : vector<8x18xf32> to vector<8x16xf32>
    %cst_30 = arith.constant dense<0.000000e+00> : vector<8x16xf32>
    %35 = tpu.matmul %33, %34, %cst_30 {dimension_numbers = #tpu.dot_dimension_numbers<[1], [0], [0], [1], [0, 0, 1, 1], [], []>} : vector<8x8xf32>, vector<8x16xf32>, vector<8x16xf32> -> vector<8x16xf32>
    %36 = arith.addf %31, %35 : vector<8x16xf32>
    %c2_31 = arith.constant 2 : index
    %c0_32 = arith.constant 0 : index
    %c0_33 = arith.constant 0 : index
    %37 = vector.load %arg5[%c2_31, %c0_32, %c0_33] : memref<3x8x8xf32, #tpu.memory_space<vmem>>, vector<1x8x8xf32>
    %38 = vector.shape_cast %37 : vector<1x8x8xf32> to vector<8x8xf32>
    %39 = vector.extract_strided_slice %27 {offsets = [0, 2], sizes = [8, 16], strides = [1, 1]} : vector<8x18xf32> to vector<8x16xf32>
    %cst_34 = arith.constant dense<0.000000e+00> : vector<8x16xf32>
    %40 = tpu.matmul %38, %39, %cst_34 {dimension_numbers = #tpu.dot_dimension_numbers<[1], [0], [0], [1], [0, 0, 1, 1], [], []>} : vector<8x8xf32>, vector<8x16xf32>, vector<8x16xf32> -> vector<8x16xf32>
    %41 = arith.addf %36, %40 : vector<8x16xf32>
    %c0_35 = arith.constant 0 : index
    %c0_36 = arith.constant 0 : index
    %42 = vector.load %arg6[%c0_35, %c0_36] : memref<8x1xf32, #tpu.memory_space<vmem>>, vector<8x1xf32>
    %43 = vector.broadcast %42 : vector<8x1xf32> to vector<8x16xf32>
    %44 = arith.addf %41, %43 : vector<8x16xf32>
    %cst_37 = arith.constant 0.000000e+00 : f32
    %45 = vector.broadcast %cst_37 : f32 to vector<8x16xf32>
    %46 = arith.maximumf %44, %45 : vector<8x16xf32>
    %c0_38 = arith.constant 0 : index
    %c0_39 = arith.constant 0 : index
    %47 = vector.load %arg7[%c0_38, %c0_39] : memref<8x4xf32, #tpu.memory_space<vmem>>, vector<8x4xf32>
    %cst_40 = arith.constant dense<0.000000e+00> : vector<8x16xf32>
    %48 = tpu.matmul %47, %4, %cst_40 {dimension_numbers = #tpu.dot_dimension_numbers<[1], [0], [0], [1], [0, 0, 1, 1], [], []>} : vector<8x4xf32>, vector<4x16xf32>, vector<8x16xf32> -> vector<8x16xf32>
    %c0_41 = arith.constant 0 : index
    %c0_42 = arith.constant 0 : index
    %49 = vector.load %arg8[%c0_41, %c0_42] : memref<8x1xf32, #tpu.memory_space<vmem>>, vector<8x1xf32>
    %50 = vector.broadcast %49 : vector<8x1xf32> to vector<8x16xf32>
    %51 = arith.addf %48, %50 : vector<8x16xf32>
    %52 = arith.addf %46, %51 : vector<8x16xf32>
    %cst_43 = arith.constant 0.000000e+00 : f32
    %53 = vector.broadcast %cst_43 : f32 to vector<8x16xf32>
    %54 = arith.maximumf %52, %53 : vector<8x16xf32>
    %c0_44 = arith.constant 0 : index
    %c0_45 = arith.constant 0 : index
    %c0_46 = arith.constant 0 : index
    %55 = vector.load %arg9[%c0_44, %c0_45, %c0_46] : memref<1x8x16xf32, #tpu.memory_space<vmem>>, vector<1x8x16xf32>
    %56 = vector.shape_cast %55 : vector<1x8x16xf32> to vector<8x16xf32>
    %57 = vector.shape_cast %54 : vector<8x16xf32> to vector<1x8x16xf32>
    tpu.vector_store %arg9[%c0_44, %c0_45, %c0_46], %57 {strides = array<i32>} : memref<1x8x16xf32, #tpu.memory_space<vmem>>, vector<1x8x16xf32>,
    %c1_i32 = arith.constant 1 : i32
    %58 = arith.addi %arg1, %c1_i32 : i32
    %c1_i32_47 = arith.constant 1 : i32
    %59 = arith.cmpi slt, %58, %c1_i32_47 : i32
    %60 = arith.extui %59 : i1 to i32
    %c0_i32_48 = arith.constant 0 : i32
    %61 = arith.cmpi ne, %60, %c0_i32_48 : i32
    scf.if %61 {
      %62 = vector.extract_strided_slice %4 {offsets = [0, 14], sizes = [4, 2], strides = [1, 1]} : vector<4x16xf32> to vector<4x2xf32>
      %c0_49 = arith.constant 0 : index
      %c0_50 = arith.constant 0 : index
      %63 = vector.load %arg10[%c0_49, %c0_50] : memref<4x18xf32, #tpu.memory_space<vmem>>, vector<4x2xf32>
      tpu.vector_store %arg10[%c0_49, %c0_50], %62 {strides = array<i32>} : memref<4x18xf32, #tpu.memory_space<vmem>>, vector<4x2xf32>,
      %64 = vector.extract_strided_slice %25 {offsets = [0, 14], sizes = [8, 2], strides = [1, 1]} : vector<8x16xf32> to vector<8x2xf32>
      %c0_51 = arith.constant 0 : index
      %c0_52 = arith.constant 0 : index
      %65 = vector.load %arg11[%c0_51, %c0_52] : memref<8x18xf32, #tpu.memory_space<vmem>>, vector<8x2xf32>
      tpu.vector_store %arg11[%c0_51, %c0_52], %64 {strides = array<i32>} : memref<8x18xf32, #tpu.memory_space<vmem>>, vector<8x2xf32>,
    } else {
    }
    return
  }
  func.func @transform_0(%arg0: i32, %arg1: i32) -> (i32, i32, i32) {
    %c0_i32 = arith.constant 0 : i32
    %c0_i32_0 = arith.constant 0 : i32
    return %arg0, %c0_i32, %arg1 : i32, i32, i32
  }
  func.func @transform_1(%arg0: i32, %arg1: i32) -> (i32, i32, i32) {
    %c0_i32 = arith.constant 0 : i32
    %c0_i32_0 = arith.constant 0 : i32
    %c0_i32_1 = arith.constant 0 : i32
    %c0_i32_2 = arith.constant 0 : i32
    return %c0_i32, %c0_i32_0, %c0_i32_1 : i32, i32, i32
  }
  func.func @transform_2(%arg0: i32, %arg1: i32) -> (i32, i32) {
    %c0_i32 = arith.constant 0 : i32
    %c0_i32_0 = arith.constant 0 : i32
    %c0_i32_1 = arith.constant 0 : i32
    return %c0_i32, %c0_i32_0 : i32, i32
  }
  func.func @transform_3(%arg0: i32, %arg1: i32) -> (i32, i32, i32) {
    %c0_i32 = arith.constant 0 : i32
    %c0_i32_0 = arith.constant 0 : i32
    %c0_i32_1 = arith.constant 0 : i32
    %c0_i32_2 = arith.constant 0 : i32
    return %c0_i32, %c0_i32_0, %c0_i32_1 : i32, i32, i32
  }
  func.func @transform_4(%arg0: i32, %arg1: i32) -> (i32, i32) {
    %c0_i32 = arith.constant 0 : i32
    %c0_i32_0 = arith.constant 0 : i32
    %c0_i32_1 = arith.constant 0 : i32
    return %c0_i32, %c0_i32_0 : i32, i32
  }
  func.func @transform_5(%arg0: i32, %arg1: i32) -> (i32, i32) {
    %c0_i32 = arith.constant 0 : i32
    %c0_i32_0 = arith.constant 0 : i32
    %c0_i32_1 = arith.constant 0 : i32
    return %c0_i32, %c0_i32_0 : i32, i32
  }
  func.func @transform_6(%arg0: i32, %arg1: i32) -> (i32, i32) {
    %c0_i32 = arith.constant 0 : i32
    %c0_i32_0 = arith.constant 0 : i32
    %c0_i32_1 = arith.constant 0 : i32
    return %c0_i32, %c0_i32_0 : i32, i32
  }
  func.func @transform_7(%arg0: i32, %arg1: i32) -> (i32, i32, i32) {
    %c0_i32 = arith.constant 0 : i32
    %c0_i32_0 = arith.constant 0 : i32
    return %arg0, %c0_i32, %arg1 : i32, i32, i32
  }
}

</mosaic_0001>

<llo_original>
// kernel: tpu_custom_call.1
$region0: #{tpu_custom_call.1}
  #allocation0 [shape = 'u32[]', space=smem, size = 0x4, offset = 0x4, fixed_abs, tag = 'smem constant byte address 0x4 - core index']
  #allocation1 [shape = 'u32[144,128]{1,0:T(1,128)}', space=vmem, size = 0x12000, scoped, tag = 'internal scratch']
  #allocation2 [shape = 'f32[4,18]{1,0:T(4,128)}', space=vmem, size = 0x800, scoped, tag = 'scratch operand']
  #allocation3 [shape = 'f32[8,18]{1,0:T(8,128)}', space=vmem, size = 0x1000, scoped, tag = 'scratch operand']
  %s0 = inlined_call_operand.vmem [shape: f32[2,4,16], index: 0, kind: input, shape index: {}]
  %s1 = inlined_call_operand.vmem [shape: f32[3,8,4], index: 1, kind: input, shape index: {}]
  %s2 = inlined_call_operand.vmem [shape: f32[8,1], index: 2, kind: input, shape index: {}]
  %s3 = inlined_call_operand.vmem [shape: f32[3,8,8], index: 3, kind: input, shape index: {}]
  %s4 = inlined_call_operand.vmem [shape: f32[8,1], index: 4, kind: input, shape index: {}]
  %s5 = inlined_call_operand.vmem [shape: f32[8,4], index: 5, kind: input, shape index: {}]
  %s6 = inlined_call_operand.vmem [shape: f32[8,1], index: 6, kind: input, shape index: {}]
  %s7 = inlined_call_operand.hbm [shape: f32[2,8,16], index: 7, kind: output, shape index: {}]
  %s8 = sld [smem:[#allocation0]]
  $region69: #{tpu_custom_call.1} parent=0
    _
  %s10 = ssub.s32 1, %s8
  %s11 = scalar_select 0, %s10, %s8
  $region1: #{tpu_custom_call.1} parent=0
    #allocation4 [shape = 'u8[8192]{0}', space=vmem, size = 0x2000, scoped, tag = 'output window, operand 0']
    #allocation5 [shape = 's32[2]{0}', space=sflag, size = 0x8, scoped, tag = 'scoped memory for tpu_custom_call.1']
    %12 = vsyncpa [#allocation5], 0
    %s13 = scalar_lea.sflag [#allocation5], 1
    %14 = vsyncpa %s13, 0
    loop: start=0, step=1, limit=4
    $region2: #{tpu_custom_call.1} parent=1 // loop_pre_header
      _
    $region3: #{tpu_custom_call.1} parent=1 // loop_header
      %s16 = sphi 0, %s20
      %p17 = scmp.ge.s32.totalorder %s16, 4
      %s23 = sphi 0, %s35
      %s24 = sphi 0, %s31
      %s25 = sphi 0, %s23
      %s26 = sphi 0, %s24
      %s27 = sphi 0, %s25
      %s28 = sphi 0, %s26
      %s40 = sphi 0, %s42
      %s43 = sphi 0, %s40
      %s44 = sphi 0, %s43
      %s60 = sphi 0, %s44
      %s64 = sphi 0, %s64
      %s66 = sphi 0, %s64
      %s67 = sphi 0, %s66
      %s81 = sphi 0, %s67
      %s85 = sphi 0, %s85
      %s87 = sphi 0, %s85
      %s88 = sphi 0, %s87
      %s102 = sphi 0, %s88
      %s106 = sphi 0, %s106
      %s108 = sphi 0, %s106
      %s109 = sphi 0, %s108
      %s123 = sphi 0, %s109
      %s127 = sphi 0, %s127
      %s129 = sphi 0, %s127
      %s130 = sphi 0, %s129
      %s144 = sphi 0, %s130
      %s148 = sphi 0, %s148
      %s150 = sphi 0, %s148
      %s151 = sphi 0, %s150
      %s165 = sphi 0, %s151
      %s169 = sphi 0, %s169
      %s171 = sphi 0, %s169
      %s172 = sphi 0, %s171
      %s186 = sphi 0, %s172
      %s194 = sphi 0, %s196
      %s197 = sphi 0, %s194
      %s198 = sphi 0, %s197
      %s214 = sphi 0, %s198
    $region4: #{tpu_custom_call.1} parent=1 // loop_header_branch
      %19 = sbr.rel (%p17) target = $region8
    $region5: #{tpu_custom_call.1} parent=1 // loop_body
      %s21 = ssub.s32 %s16, 1
      %s22 = ssub.s32 %s16, 2
      %s29 = sadd.s32 1, %s24
      %p30 = scmp.ge.s32.totalorder %s29, 1
      %s31 = scalar_select %p30, 0, %s29
      %s32 = sadd.s32 1, %s23
      %s33 = scalar_select %p30, %s32, %s23
      %p34 = scmp.ge.s32.totalorder %s33, 2
      %s35 = scalar_select %p34, 0, %s33
      %s36 = ssub.s32 %s23, %s35
      %s37 = ssub.s32 %s24, %s31
      %s38 = sor.u32 %s36, %s37
      %p39 = scmp.eq.s32.totalorder %s38, 0
      %s41 = sadd.s32 %s40, 1
      %s42 = scalar_select %p39, %s40, %s41
      %p45 = pneg %p39
      %p46 = scmp.eq.s32.totalorder %s16, 1
      %p47 = por %p45, %p46
      %p48 = scmp.ne.s32.totalorder %s40, %s43
      %p49 = scmp.eq.s32.totalorder %s16, 0
      %p50 = por %p48, %p49
      %p51 = scmp.ne.s32.totalorder %s40, %s43
      %p52 = scmp.eq.s32.totalorder %s21, 1
      %p53 = por %p51, %p52
      %p54 = scmp.ne.s32.totalorder %s43, %s44
      %p55 = scmp.eq.s32.totalorder %s21, 0
      %p56 = por %p54, %p55
      %p57 = scmp.ne.s32.totalorder %s43, %s44
      %p58 = scmp.eq.s32.totalorder %s22, 1
      %p59 = por %p57, %p58
      %p61 = scmp.ne.s32.totalorder %s44, %s60
      %p62 = scmp.eq.s32.totalorder %s22, 0
      %p63 = por %p61, %p62
      %s65 = sadd.s32 %s64, 1
      %p68 = scmp.eq.s32.totalorder %s16, 1
      %p69 = scmp.ne.s32.totalorder %s64, %s66
      %p70 = scmp.eq.s32.totalorder %s16, 0
      %p71 = por %p69, %p70
      %p72 = scmp.ne.s32.totalorder %s64, %s66
      %p73 = scmp.eq.s32.totalorder %s21, 1
      %p74 = por %p72, %p73
      %p75 = scmp.ne.s32.totalorder %s66, %s67
      %p76 = scmp.eq.s32.totalorder %s21, 0
      %p77 = por %p75, %p76
      %p78 = scmp.ne.s32.totalorder %s66, %s67
      %p79 = scmp.eq.s32.totalorder %s22, 1
      %p80 = por %p78, %p79
      %p82 = scmp.ne.s32.totalorder %s67, %s81
      %p83 = scmp.eq.s32.totalorder %s22, 0
      %p84 = por %p82, %p83
      %s86 = sadd.s32 %s85, 1
      %p89 = scmp.eq.s32.totalorder %s16, 1
      %p90 = scmp.ne.s32.totalorder %s85, %s87
      %p91 = scmp.eq.s32.totalorder %s16, 0
      %p92 = por %p90, %p91
      %p93 = scmp.ne.s32.totalorder %s85, %s87
      %p94 = scmp.eq.s32.totalorder %s21, 1
      %p95 = por %p93, %p94
      %p96 = scmp.ne.s32.totalorder %s87, %s88
      %p97 = scmp.eq.s32.totalorder %s21, 0
      %p98 = por %p96, %p97
      %p99 = scmp.ne.s32.totalorder %s87, %s88
      %p100 = scmp.eq.s32.totalorder %s22, 1
      %p101 = por %p99, %p100
      %p103 = scmp.ne.s32.totalorder %s88, %s102
      %p104 = scmp.eq.s32.totalorder %s22, 0
      %p105 = por %p103, %p104
      %s107 = sadd.s32 %s106, 1
      %p110 = scmp.eq.s32.totalorder %s16, 1
      %p111 = scmp.ne.s32.totalorder %s106, %s108
      %p112 = scmp.eq.s32.totalorder %s16, 0
      %p113 = por %p111, %p112
      %p114 = scmp.ne.s32.totalorder %s106, %s108
      %p115 = scmp.eq.s32.totalorder %s21, 1
      %p116 = por %p114, %p115
      %p117 = scmp.ne.s32.totalorder %s108, %s109
      %p118 = scmp.eq.s32.totalorder %s21, 0
      %p119 = por %p117, %p118
      %p120 = scmp.ne.s32.totalorder %s108, %s109
      %p121 = scmp.eq.s32.totalorder %s22, 1
      %p122 = por %p120, %p121
      %p124 = scmp.ne.s32.totalorder %s109, %s123
      %p125 = scmp.eq.s32.totalorder %s22, 0
      %p126 = por %p124, %p125
      %s128 = sadd.s32 %s127, 1
      %p131 = scmp.eq.s32.totalorder %s16, 1
      %p132 = scmp.ne.s32.totalorder %s127, %s129
      %p133 = scmp.eq.s32.totalorder %s16, 0
      %p134 = por %p132, %p133
      %p135 = scmp.ne.s32.totalorder %s127, %s129
      %p136 = scmp.eq.s32.totalorder %s21, 1
      %p137 = por %p135, %p136
      %p138 = scmp.ne.s32.totalorder %s129, %s130
      %p139 = scmp.eq.s32.totalorder %s21, 0
      %p140 = por %p138, %p139
      %p141 = scmp.ne.s32.totalorder %s129, %s130
      %p142 = scmp.eq.s32.totalorder %s22, 1
      %p143 = por %p141, %p142
      %p145 = scmp.ne.s32.totalorder %s130, %s144
      %p146 = scmp.eq.s32.totalorder %s22, 0
      %p147 = por %p145, %p146
      %s149 = sadd.s32 %s148, 1
      %p152 = scmp.eq.s32.totalorder %s16, 1
      %p153 = scmp.ne.s32.totalorder %s148, %s150
      %p154 = scmp.eq.s32.totalorder %s16, 0
      %p155 = por %p153, %p154
      %p156 = scmp.ne.s32.totalorder %s148, %s150
      %p157 = scmp.eq.s32.totalorder %s21, 1
      %p158 = por %p156, %p157
      %p159 = scmp.ne.s32.totalorder %s150, %s151
      %p160 = scmp.eq.s32.totalorder %s21, 0
      %p161 = por %p159, %p160
      %p162 = scmp.ne.s32.totalorder %s150, %s151
      %p163 = scmp.eq.s32.totalorder %s22, 1
      %p164 = por %p162, %p163
      %p166 = scmp.ne.s32.totalorder %s151, %s165
      %p167 = scmp.eq.s32.totalorder %s22, 0
      %p168 = por %p166, %p167
      %s170 = sadd.s32 %s169, 1
      %p173 = scmp.eq.s32.totalorder %s16, 1
      %p174 = scmp.ne.s32.totalorder %s169, %s171
      %p175 = scmp.eq.s32.totalorder %s16, 0
      %p176 = por %p174, %p175
      %p177 = scmp.ne.s32.totalorder %s169, %s171
      %p178 = scmp.eq.s32.totalorder %s21, 1
      %p179 = por %p177, %p178
      %p180 = scmp.ne.s32.totalorder %s171, %s172
      %p181 = scmp.eq.s32.totalorder %s21, 0
      %p182 = por %p180, %p181
      %p183 = scmp.ne.s32.totalorder %s171, %s172
      %p184 = scmp.eq.s32.totalorder %s22, 1
      %p185 = por %p183, %p184
      %p187 = scmp.ne.s32.totalorder %s172, %s186
      %p188 = scmp.eq.s32.totalorder %s22, 0
      %p189 = por %p187, %p188
      %s190 = ssub.s32 %s23, %s35
      %s191 = ssub.s32 %s24, %s31
      %s192 = sor.u32 %s190, %s191
      %p193 = scmp.eq.s32.totalorder %s192, 0
      %s195 = sadd.s32 %s194, 1
      %s196 = scalar_select %p193, %s194, %s195
      %p199 = pneg %p193
      %p200 = scmp.eq.s32.totalorder %s16, 1
      %p201 = por %p199, %p200
      %p202 = scmp.ne.s32.totalorder %s194, %s197
      %p203 = scmp.eq.s32.totalorder %s16, 0
      %p204 = por %p202, %p203
      %p205 = scmp.ne.s32.totalorder %s194, %s197
      %p206 = scmp.eq.s32.totalorder %s21, 1
      %p207 = por %p205, %p206
      %p208 = scmp.ne.s32.totalorder %s197, %s198
      %p209 = scmp.eq.s32.totalorder %s21, 0
      %p210 = por %p208, %p209
      %p211 = scmp.ne.s32.totalorder %s197, %s198
      %p212 = scmp.eq.s32.totalorder %s22, 1
      %p213 = por %p211, %p212
      %p215 = scmp.ne.s32.totalorder %s198, %s214
      %p216 = scmp.eq.s32.totalorder %s22, 0
      %p217 = por %p215, %p216
      %p218 = scmp.le.s32.totalorder 1, %s16
      %p219 = scmp.lt.s32.totalorder %s16, 3
      %p220 = pnand %p218, %p219
      %p221 = pneg %p220
      // Predicated region
      $region9: #{tpu_custom_call.1} parent=5 // pred_check
        _
      $region10: #{tpu_custom_call.1} parent=5 // pred_check_branch
        %223 = sbr.rel (%p220) target = $region12
      $region11: #{tpu_custom_call.1} parent=5 // pred_region
        %s224 = ssub.s32 %s16, 1
        // Predicated region
        $region13: #{tpu_custom_call.1} parent=11 // pred_check
          %p225 = pneg %p77
        $region14: #{tpu_custom_call.1} parent=11 // pred_check_branch
          %227 = sbr.rel (%p225) target = $region16
        $region15: #{tpu_custom_call.1} parent=11 // pred_region
          _
        $region16: #{tpu_custom_call.1} parent=11 // pred_fallthru
          _
        // Predicated region
        $region17: #{tpu_custom_call.1} parent=11 // pred_check
          %p228 = pneg %p98
        $region18: #{tpu_custom_call.1} parent=11 // pred_check_branch
          %230 = sbr.rel (%p228) target = $region20
        $region19: #{tpu_custom_call.1} parent=11 // pred_region
          _
        $region20: #{tpu_custom_call.1} parent=11 // pred_fallthru
          _
        // Predicated region
        $region21: #{tpu_custom_call.1} parent=11 // pred_check
          %p231 = pneg %p119
        $region22: #{tpu_custom_call.1} parent=11 // pred_check_branch
          %233 = sbr.rel (%p231) target = $region24
        $region23: #{tpu_custom_call.1} parent=11 // pred_region
          _
        $region24: #{tpu_custom_call.1} parent=11 // pred_fallthru
          _
        // Predicated region
        $region25: #{tpu_custom_call.1} parent=11 // pred_check
          %p234 = pneg %p140
        $region26: #{tpu_custom_call.1} parent=11 // pred_check_branch
          %236 = sbr.rel (%p234) target = $region28
        $region27: #{tpu_custom_call.1} parent=11 // pred_region
          _
        $region28: #{tpu_custom_call.1} parent=11 // pred_fallthru
          _
        // Predicated region
        $region29: #{tpu_custom_call.1} parent=11 // pred_check
          %p237 = pneg %p161
        $region30: #{tpu_custom_call.1} parent=11 // pred_check_branch
          %239 = sbr.rel (%p237) target = $region32
        $region31: #{tpu_custom_call.1} parent=11 // pred_region
          _
        $region32: #{tpu_custom_call.1} parent=11 // pred_fallthru
          _
        // Predicated region
        $region33: #{tpu_custom_call.1} parent=11 // pred_check
          %p240 = pneg %p182
        $region34: #{tpu_custom_call.1} parent=11 // pred_check_branch
          %242 = sbr.rel (%p240) target = $region36
        $region35: #{tpu_custom_call.1} parent=11 // pred_region
          _
        $region36: #{tpu_custom_call.1} parent=11 // pred_fallthru
          _
      $region12: #{tpu_custom_call.1} parent=5 // pred_fallthru
        _
      %p243 = scmp.lt.s32.totalorder %s16, 2
      // Predicated region
      $region37: #{tpu_custom_call.1} parent=5 // pred_check
        %p244 = pneg %p243
      $region38: #{tpu_custom_call.1} parent=5 // pred_check_branch
        %246 = sbr.rel (%p244) target = $region40
      $region39: #{tpu_custom_call.1} parent=5 // pred_region
        // Predicated region
        $region41: #{tpu_custom_call.1} parent=39 // pred_check
          %p247 = pneg %p50
        $region42: #{tpu_custom_call.1} parent=39 // pred_check_branch
          %249 = sbr.rel (%p247) target = $region44
        $region43: #{tpu_custom_call.1} parent=39 // pred_region
          %p250 = scmp.lt.s32.totalorder %s23, 1
          %s251 = scalar_select %p250, %s23, 1
          %p252 = scmp.lt.s32.totalorder %s24, 0
          %s253 = scalar_select %p252, %s24, 0
          %s254 = sadd.s32 %s253, %s251
          %s255 = smul.addr %s254, 4
          %s256 = scalar_lea.vmem %s0, %s255
        $region44: #{tpu_custom_call.1} parent=39 // pred_fallthru
          _
      $region40: #{tpu_custom_call.1} parent=5 // pred_fallthru
        _
      %p257 = scmp.le.s32.totalorder 1, %s16
      %p258 = scmp.lt.s32.totalorder %s16, 3
      %p259 = pnand %p257, %p258
      %p260 = pneg %p259
      // Predicated region
      $region45: #{tpu_custom_call.1} parent=5 // pred_check
        _
      $region46: #{tpu_custom_call.1} parent=5 // pred_check_branch
        %262 = sbr.rel (%p259) target = $region48
      $region47: #{tpu_custom_call.1} parent=5 // pred_region
        %s263 = ssub.s32 %s16, 1
        %p264 = scmp.lt.s32.totalorder %s25, 1
        %s265 = scalar_select %p264, %s25, 1
        %p266 = scmp.lt.s32.totalorder %s26, 0
        %s267 = scalar_select %p266, %s26, 0
        %s268 = sadd.s32 %s267, %s265
        %s269 = smul.addr %s268, 4
        %s270 = scalar_lea.vmem %s0, %s269
        %p271 = pneg %p56
        %p272 = pneg %p53
        %p273 = pneg %p77
        %p274 = pneg %p74
        %p275 = pneg %p98
        %p276 = pneg %p95
        %p277 = pneg %p119
        %p278 = pneg %p116
        %p279 = pneg %p140
        %p280 = pneg %p137
        %p281 = pneg %p161
        %p282 = pneg %p158
        %p283 = pneg %p182
        %p284 = pneg %p179
        %p285 = pneg %p210
        %p286 = pneg %p207
        %s287 = sand.u32 %s197, 1
        %s288 = scalar_lea.sflag [#allocation5], %s287
        %s289 = sand.u32 %s197, 1
        %s290 = smul.addr %s289, 8
        %s291 = scalar_lea.vmem [#allocation4], %s290
        %p292 = scmp.lt.s32.totalorder %s25, 1
        %s293 = scalar_select %p292, %s25, 1
        %p294 = scmp.lt.s32.totalorder %s26, 0
        %s295 = scalar_select %p294, %s26, 0
        %s296 = sadd.s32 %s295, %s293
        %s297 = smul.addr %s296, 4
        %s298 = scalar_lea.vmem %s0, %s297
        %p299 = scmp.eq.s32.totalorder %s26, 0
        // Predicated region
        $region49: #{tpu_custom_call.1} parent=47 // pred_check
          %p300 = pneg %p299
        $region50: #{tpu_custom_call.1} parent=47 // pred_check_branch
          %302 = sbr.rel (%p300) target = $region52
        $region51: #{tpu_custom_call.1} parent=47 // pred_region
          %vm303 = vcmask 11264
          %304 = vst.msk [vmem:[#allocation2] sm:$0xf] %vm303, 0.0
          %vm305 = vcmask 15360
          %306 = vst.msk [vmem:[#allocation3] sm:$0xff] %vm305, 0.0
        $region52: #{tpu_custom_call.1} parent=47 // pred_fallthru
          _
        %v307 = vld [vmem:[%s298] sm:$0xf]
        %309 = vrot.lane.b32.xlu0 %v307, 2
        %v310 = vpop.permute.xlu0 %309
        %vm312 = vcmask 142352
        %313 = vst.msk [vmem:[#allocation2] sm:$0xf] %vm312, %v310
        %v314 = vld [vmem:[#allocation2] sm:$0xf]
        %v315 = vld [vmem:[%s1] sm:$0xff]
        %s316 = scalar_lea.vmem %s1, 8
        %v317 = vld [vmem:[%s316] sm:$0xff]
        %319 = vrot.lane.b32.xlu0 %v314, 127
        %v320 = vpop.permute.xlu0 %319
        %vm321 = vcmask 31744
        %v323 = vsel %vm321, %v317, 0
        %vm325 = vcmask 1043456
        %v326 = vsel %vm325, %v320, 0
        %328 = vmatprep.subr.mxu0 0.0
        %329 = vmatpush1.msra.mxu0 %v326
        %330 = vmatprep.subr.mxu0 0.0
        %331 = vmatpush1.msra.mxu0 0.0
        %332 = vmatprep.subr.mxu0 0.0
        %333 = vmatpush1.msra.mxu0 0.0
        %334 = vmatprep.subr.mxu0 0.0
        %335 = vmatpush1.msra.mxu0 0.0
        %336 = vmatprep.subr.mxu0 0.0
        %337 = vmatpush1.msra.mxu0 0.0
        %338 = vmatprep.subr.mxu0 0.0
        %339 = vmatpush1.msra.mxu0 0.0
        %340 = vmatprep.subr.mxu0 0.0
        %341 = vmatpush1.msra.mxu0 0.0
        %342 = vmatprep.subr.mxu0 0.0
        %343 = vmatpush1.msra.mxu0 0.0
        %344 = vmatprep.subr.mxu0 0.0
        %345 = vmatpush1.msra.mxu0 0.0
        %346 = vmatprep.subr.mxu0 0.0
        %347 = vmatpush1.msra.mxu0 0.0
        %348 = vmatprep.subr.mxu0 0.0
        %349 = vmatpush1.msra.mxu0 0.0
        %350 = vmatprep.subr.mxu0 0.0
        %351 = vmatpush1.msra.mxu0 0.0
        %352 = vmatprep.subr.mxu0 0.0
        %353 = vmatpush1.msra.mxu0 0.0
        %354 = vmatprep.subr.mxu0 0.0
        %355 = vmatpush1.msra.mxu0 0.0
        %356 = vmatprep.subr.mxu0 0.0
        %357 = vmatpush1.msra.mxu0 0.0
        %358 = vmatprep.subr.mxu0 0.0
        %359 = vmatpush1.msra.mxu0 0.0
        %360 = vmatprep.subr.mxu0 0.0
        %361 = vmatpush1.msra.mxu0 0.0
        %362 = vmatprep.subr.mxu0 0.0
        %363 = vmatpush1.msra.mxu0 0.0
        %364 = vmatprep.subr.mxu0 0.0
        %365 = vmatpush1.msra.mxu0 0.0
        %366 = vmatprep.subr.mxu0 0.0
        %367 = vmatpush1.msra.mxu0 0.0
        %368 = vmatprep.subr.mxu0 0.0
        %369 = vmatpush1.msra.mxu0 0.0
        %370 = vmatprep.subr.mxu0 0.0
        %371 = vmatpush1.msra.mxu0 0.0
        %372 = vmatprep.subr.mxu0 0.0
        %373 = vmatpush1.msra.mxu0 0.0
        %374 = vmatprep.subr.mxu0 0.0
        %375 = vmatpush1.msra.mxu0 0.0
        %376 = vmatprep.subr.mxu0 0.0
        %377 = vmatpush1.msra.mxu0 0.0
        %378 = vmatprep.subr.mxu0 0.0
        %379 = vmatpush1.msra.mxu0 0.0
        %380 = vmatprep.subr.mxu0 0.0
        %381 = vmatpush1.msra.mxu0 0.0
        %382 = vmatprep.subr.mxu0 0.0
        %383 = vmatpush1.msra.mxu0 0.0
        %384 = vmatprep.subr.mxu0 0.0
        %385 = vmatpush1.msra.mxu0 0.0
        %386 = vmatprep.subr.mxu0 0.0
        %387 = vmatpush1.msra.mxu0 0.0
        %388 = vmatprep.subr.mxu0 0.0
        %389 = vmatpush1.msra.mxu0 0.0
        %390 = vmatprep.subr.mxu0 0.0
        %391 = vmatpush1.msra.mxu0 0.0
        %392 = vmatprep.mubr.f32.mxu0 0.0
        %393 = vmatmul.mubr.f32.gmra.mrb[0].mxu0 %v323
        %v394 = vpop.f32.mrb[0].mxu0
        %v395 = vadd.f32 0.0, %v394
        %v396 = vpop.f32.mrb[0].mxu0
        %397 = vdwg.mxu0
        %v399 = vsel %vm321, %v315, 0
        %v401 = vsel %vm325, %v314, 0
        %403 = vmatprep.subr.mxu0 0.0
        %404 = vmatpush1.msra.mxu0 %v401
        %405 = vmatprep.subr.mxu0 0.0
        %406 = vmatpush1.msra.mxu0 0.0
        %407 = vmatprep.subr.mxu0 0.0
        %408 = vmatpush1.msra.mxu0 0.0
        %409 = vmatprep.subr.mxu0 0.0
        %410 = vmatpush1.msra.mxu0 0.0
        %411 = vmatprep.subr.mxu0 0.0
        %412 = vmatpush1.msra.mxu0 0.0
        %413 = vmatprep.subr.mxu0 0.0
        %414 = vmatpush1.msra.mxu0 0.0
        %415 = vmatprep.subr.mxu0 0.0
        %416 = vmatpush1.msra.mxu0 0.0
        %417 = vmatprep.subr.mxu0 0.0
        %418 = vmatpush1.msra.mxu0 0.0
        %419 = vmatprep.subr.mxu0 0.0
        %420 = vmatpush1.msra.mxu0 0.0
        %421 = vmatprep.subr.mxu0 0.0
        %422 = vmatpush1.msra.mxu0 0.0
        %423 = vmatprep.subr.mxu0 0.0
        %424 = vmatpush1.msra.mxu0 0.0
        %425 = vmatprep.subr.mxu0 0.0
        %426 = vmatpush1.msra.mxu0 0.0
        %427 = vmatprep.subr.mxu0 0.0
        %428 = vmatpush1.msra.mxu0 0.0
        %429 = vmatprep.subr.mxu0 0.0
        %430 = vmatpush1.msra.mxu0 0.0
        %431 = vmatprep.subr.mxu0 0.0
        %432 = vmatpush1.msra.mxu0 0.0
        %433 = vmatprep.subr.mxu0 0.0
        %434 = vmatpush1.msra.mxu0 0.0
        %435 = vmatprep.subr.mxu0 0.0
        %436 = vmatpush1.msra.mxu0 0.0
        %437 = vmatprep.subr.mxu0 0.0
        %438 = vmatpush1.msra.mxu0 0.0
        %439 = vmatprep.subr.mxu0 0.0
        %440 = vmatpush1.msra.mxu0 0.0
        %441 = vmatprep.subr.mxu0 0.0
        %442 = vmatpush1.msra.mxu0 0.0
        %443 = vmatprep.subr.mxu0 0.0
        %444 = vmatpush1.msra.mxu0 0.0
        %445 = vmatprep.subr.mxu0 0.0
        %446 = vmatpush1.msra.mxu0 0.0
        %447 = vmatprep.subr.mxu0 0.0
        %448 = vmatpush1.msra.mxu0 0.0
        %449 = vmatprep.subr.mxu0 0.0
        %450 = vmatpush1.msra.mxu0 0.0
        %451 = vmatprep.subr.mxu0 0.0
        %452 = vmatpush1.msra.mxu0 0.0
        %453 = vmatprep.subr.mxu0 0.0
        %454 = vmatpush1.msra.mxu0 0.0
        %455 = vmatprep.subr.mxu0 0.0
        %456 = vmatpush1.msra.mxu0 0.0
        %457 = vmatprep.subr.mxu0 0.0
        %458 = vmatpush1.msra.mxu0 0.0
        %459 = vmatprep.subr.mxu0 0.0
        %460 = vmatpush1.msra.mxu0 0.0
        %461 = vmatprep.subr.mxu0 0.0
        %462 = vmatpush1.msra.mxu0 0.0
        %463 = vmatprep.subr.mxu0 0.0
        %464 = vmatpush1.msra.mxu0 0.0
        %465 = vmatprep.subr.mxu0 0.0
        %466 = vmatpush1.msra.mxu0 0.0
        %467 = vmatprep.mubr.f32.mxu0 0.0
        %468 = vmatmul.mubr.f32.gmra.mrb[0].mxu0 %v399
        %v469 = vpop.f32.mrb[0].mxu0
        %v470 = vadd.f32 %v395, %v469
        %v471 = vpop.f32.mrb[0].mxu0
        %472 = vdwg.mxu0
        %s473 = scalar_lea.vmem %s1, 16
        %v474 = vld [vmem:[%s473] sm:$0xff]
        %475 = vrot.lane.b32.xlu0 %v314, 126
        %v476 = vpop.permute.xlu0 %475
        %v478 = vsel %vm321, %v474, 0
        %v480 = vsel %vm325, %v476, 0
        %482 = vmatprep.subr.mxu0 0.0
        %483 = vmatpush1.msra.mxu0 %v480
        %484 = vmatprep.subr.mxu0 0.0
        %485 = vmatpush1.msra.mxu0 0.0
        %486 = vmatprep.subr.mxu0 0.0
        %487 = vmatpush1.msra.mxu0 0.0
        %488 = vmatprep.subr.mxu0 0.0
        %489 = vmatpush1.msra.mxu0 0.0
        %490 = vmatprep.subr.mxu0 0.0
        %491 = vmatpush1.msra.mxu0 0.0
        %492 = vmatprep.subr.mxu0 0.0
        %493 = vmatpush1.msra.mxu0 0.0
        %494 = vmatprep.subr.mxu0 0.0
        %495 = vmatpush1.msra.mxu0 0.0
        %496 = vmatprep.subr.mxu0 0.0
        %497 = vmatpush1.msra.mxu0 0.0
        %498 = vmatprep.subr.mxu0 0.0
        %499 = vmatpush1.msra.mxu0 0.0
        %500 = vmatprep.subr.mxu0 0.0
        %501 = vmatpush1.msra.mxu0 0.0
        %502 = vmatprep.subr.mxu0 0.0
        %503 = vmatpush1.msra.mxu0 0.0
        %504 = vmatprep.subr.mxu0 0.0
        %505 = vmatpush1.msra.mxu0 0.0
        %506 = vmatprep.subr.mxu0 0.0
        %507 = vmatpush1.msra.mxu0 0.0
        %508 = vmatprep.subr.mxu0 0.0
        %509 = vmatpush1.msra.mxu0 0.0
        %510 = vmatprep.subr.mxu0 0.0
        %511 = vmatpush1.msra.mxu0 0.0
        %512 = vmatprep.subr.mxu0 0.0
        %513 = vmatpush1.msra.mxu0 0.0
        %514 = vmatprep.subr.mxu0 0.0
        %515 = vmatpush1.msra.mxu0 0.0
        %516 = vmatprep.subr.mxu0 0.0
        %517 = vmatpush1.msra.mxu0 0.0
        %518 = vmatprep.subr.mxu0 0.0
        %519 = vmatpush1.msra.mxu0 0.0
        %520 = vmatprep.subr.mxu0 0.0
        %521 = vmatpush1.msra.mxu0 0.0
        %522 = vmatprep.subr.mxu0 0.0
        %523 = vmatpush1.msra.mxu0 0.0
        %524 = vmatprep.subr.mxu0 0.0
        %525 = vmatpush1.msra.mxu0 0.0
        %526 = vmatprep.subr.mxu0 0.0
        %527 = vmatpush1.msra.mxu0 0.0
        %528 = vmatprep.subr.mxu0 0.0
        %529 = vmatpush1.msra.mxu0 0.0
        %530 = vmatprep.subr.mxu0 0.0
        %531 = vmatpush1.msra.mxu0 0.0
        %532 = vmatprep.subr.mxu0 0.0
        %533 = vmatpush1.msra.mxu0 0.0
        %534 = vmatprep.subr.mxu0 0.0
        %535 = vmatpush1.msra.mxu0 0.0
        %536 = vmatprep.subr.mxu0 0.0
        %537 = vmatpush1.msra.mxu0 0.0
        %538 = vmatprep.subr.mxu0 0.0
        %539 = vmatpush1.msra.mxu0 0.0
        %540 = vmatprep.subr.mxu0 0.0
        %541 = vmatpush1.msra.mxu0 0.0
        %542 = vmatprep.subr.mxu0 0.0
        %543 = vmatpush1.msra.mxu0 0.0
        %544 = vmatprep.subr.mxu0 0.0
        %545 = vmatpush1.msra.mxu0 0.0
        %546 = vmatprep.mubr.f32.mxu0 0.0
        %547 = vmatmul.mubr.f32.gmra.mrb[0].mxu0 %v478
        %v548 = vpop.f32.mrb[0].mxu0
        %v549 = vadd.f32 0.0, %v548
        %v550 = vpop.f32.mrb[0].mxu0
        %551 = vdwg.mxu0
        %v552 = vadd.f32 %v470, %v549
        %v553 = vld [vmem:[%s2] sm:$0xff]
        %555 = vset.pattern.permute.xlu0 0
        %556 = vperm.xlu0 %555, %v553
        %v557 = vpop.permute.xlu0 %556
        %v559 = vadd.f32 %v552, %v557
        %v560 = vmax.f32 %v559, 0.0
        %562 = vrot.lane.b32.xlu0 %v560, 2
        %v563 = vpop.permute.xlu0 %562
        %vm565 = vcmask 146448
        %566 = vst.msk [vmem:[#allocation3] sm:$0xff] %vm565, %v563
        %v567 = vld [vmem:[#allocation3] sm:$0xff]
        %v568 = vld [vmem:[%s3] sm:$0xff]
        %s569 = scalar_lea.vmem %s3, 8
        %v570 = vld [vmem:[%s569] sm:$0xff]
        %572 = vrot.lane.b32.xlu0 %v567, 127
        %v573 = vpop.permute.xlu0 %572
        %vm575 = vcmask 64512
        %v577 = vsel %vm575, %v570, 0
        %579 = vmatprep.subr.mxu0 0.0
        %580 = vmatpush1.msra.mxu0 %v573
        %581 = vmatprep.subr.mxu0 0.0
        %582 = vmatpush1.msra.mxu0 0.0
        %583 = vmatprep.subr.mxu0 0.0
        %584 = vmatpush1.msra.mxu0 0.0
        %585 = vmatprep.subr.mxu0 0.0
        %586 = vmatpush1.msra.mxu0 0.0
        %587 = vmatprep.subr.mxu0 0.0
        %588 = vmatpush1.msra.mxu0 0.0
        %589 = vmatprep.subr.mxu0 0.0
        %590 = vmatpush1.msra.mxu0 0.0
        %591 = vmatprep.subr.mxu0 0.0
        %592 = vmatpush1.msra.mxu0 0.0
        %593 = vmatprep.subr.mxu0 0.0
        %594 = vmatpush1.msra.mxu0 0.0
        %595 = vmatprep.subr.mxu0 0.0
        %596 = vmatpush1.msra.mxu0 0.0
        %597 = vmatprep.subr.mxu0 0.0
        %598 = vmatpush1.msra.mxu0 0.0
        %599 = vmatprep.subr.mxu0 0.0
        %600 = vmatpush1.msra.mxu0 0.0
        %601 = vmatprep.subr.mxu0 0.0
        %602 = vmatpush1.msra.mxu0 0.0
        %603 = vmatprep.subr.mxu0 0.0
        %604 = vmatpush1.msra.mxu0 0.0
        %605 = vmatprep.subr.mxu0 0.0
        %606 = vmatpush1.msra.mxu0 0.0
        %607 = vmatprep.subr.mxu0 0.0
        %608 = vmatpush1.msra.mxu0 0.0
        %609 = vmatprep.subr.mxu0 0.0
        %610 = vmatpush1.msra.mxu0 0.0
        %611 = vmatprep.subr.mxu0 0.0
        %612 = vmatpush1.msra.mxu0 0.0
        %613 = vmatprep.subr.mxu0 0.0
        %614 = vmatpush1.msra.mxu0 0.0
        %615 = vmatprep.subr.mxu0 0.0
        %616 = vmatpush1.msra.mxu0 0.0
        %617 = vmatprep.subr.mxu0 0.0
        %618 = vmatpush1.msra.mxu0 0.0
        %619 = vmatprep.subr.mxu0 0.0
        %620 = vmatpush1.msra.mxu0 0.0
        %621 = vmatprep.subr.mxu0 0.0
        %622 = vmatpush1.msra.mxu0 0.0
        %623 = vmatprep.subr.mxu0 0.0
        %624 = vmatpush1.msra.mxu0 0.0
        %625 = vmatprep.subr.mxu0 0.0
        %626 = vmatpush1.msra.mxu0 0.0
        %627 = vmatprep.subr.mxu0 0.0
        %628 = vmatpush1.msra.mxu0 0.0
        %629 = vmatprep.subr.mxu0 0.0
        %630 = vmatpush1.msra.mxu0 0.0
        %631 = vmatprep.subr.mxu0 0.0
        %632 = vmatpush1.msra.mxu0 0.0
        %633 = vmatprep.subr.mxu0 0.0
        %634 = vmatpush1.msra.mxu0 0.0
        %635 = vmatprep.subr.mxu0 0.0
        %636 = vmatpush1.msra.mxu0 0.0
        %637 = vmatprep.subr.mxu0 0.0
        %638 = vmatpush1.msra.mxu0 0.0
        %639 = vmatprep.subr.mxu0 0.0
        %640 = vmatpush1.msra.mxu0 0.0
        %641 = vmatprep.subr.mxu0 0.0
        %642 = vmatpush1.msra.mxu0 0.0
        %643 = vmatprep.mubr.f32.mxu0 0.0
        %644 = vmatmul.mubr.f32.gmra.mrb[0].mxu0 %v577
        %v645 = vpop.f32.mrb[0].mxu0
        %v646 = vadd.f32 0.0, %v645
        %v647 = vpop.f32.mrb[0].mxu0
        %648 = vdwg.mxu0
        %v650 = vsel %vm575, %v568, 0
        %652 = vmatprep.subr.mxu0 0.0
        %653 = vmatpush1.msra.mxu0 %v567
        %654 = vmatprep.subr.mxu0 0.0
        %655 = vmatpush1.msra.mxu0 0.0
        %656 = vmatprep.subr.mxu0 0.0
        %657 = vmatpush1.msra.mxu0 0.0
        %658 = vmatprep.subr.mxu0 0.0
        %659 = vmatpush1.msra.mxu0 0.0
        %660 = vmatprep.subr.mxu0 0.0
        %661 = vmatpush1.msra.mxu0 0.0
        %662 = vmatprep.subr.mxu0 0.0
        %663 = vmatpush1.msra.mxu0 0.0
        %664 = vmatprep.subr.mxu0 0.0
        %665 = vmatpush1.msra.mxu0 0.0
        %666 = vmatprep.subr.mxu0 0.0
        %667 = vmatpush1.msra.mxu0 0.0
        %668 = vmatprep.subr.mxu0 0.0
        %669 = vmatpush1.msra.mxu0 0.0
        %670 = vmatprep.subr.mxu0 0.0
        %671 = vmatpush1.msra.mxu0 0.0
        %672 = vmatprep.subr.mxu0 0.0
        %673 = vmatpush1.msra.mxu0 0.0
        %674 = vmatprep.subr.mxu0 0.0
        %675 = vmatpush1.msra.mxu0 0.0
        %676 = vmatprep.subr.mxu0 0.0
        %677 = vmatpush1.msra.mxu0 0.0
        %678 = vmatprep.subr.mxu0 0.0
        %679 = vmatpush1.msra.mxu0 0.0
        %680 = vmatprep.subr.mxu0 0.0
        %681 = vmatpush1.msra.mxu0 0.0
        %682 = vmatprep.subr.mxu0 0.0
        %683 = vmatpush1.msra.mxu0 0.0
        %684 = vmatprep.subr.mxu0 0.0
        %685 = vmatpush1.msra.mxu0 0.0
        %686 = vmatprep.subr.mxu0 0.0
        %687 = vmatpush1.msra.mxu0 0.0
        %688 = vmatprep.subr.mxu0 0.0
        %689 = vmatpush1.msra.mxu0 0.0
        %690 = vmatprep.subr.mxu0 0.0
        %691 = vmatpush1.msra.mxu0 0.0
        %692 = vmatprep.subr.mxu0 0.0
        %693 = vmatpush1.msra.mxu0 0.0
        %694 = vmatprep.subr.mxu0 0.0
        %695 = vmatpush1.msra.mxu0 0.0
        %696 = vmatprep.subr.mxu0 0.0
        %697 = vmatpush1.msra.mxu0 0.0
        %698 = vmatprep.subr.mxu0 0.0
        %699 = vmatpush1.msra.mxu0 0.0
        %700 = vmatprep.subr.mxu0 0.0
        %701 = vmatpush1.msra.mxu0 0.0
        %702 = vmatprep.subr.mxu0 0.0
        %703 = vmatpush1.msra.mxu0 0.0
        %704 = vmatprep.subr.mxu0 0.0
        %705 = vmatpush1.msra.mxu0 0.0
        %706 = vmatprep.subr.mxu0 0.0
        %707 = vmatpush1.msra.mxu0 0.0
        %708 = vmatprep.subr.mxu0 0.0
        %709 = vmatpush1.msra.mxu0 0.0
        %710 = vmatprep.subr.mxu0 0.0
        %711 = vmatpush1.msra.mxu0 0.0
        %712 = vmatprep.subr.mxu0 0.0
        %713 = vmatpush1.msra.mxu0 0.0
        %714 = vmatprep.subr.mxu0 0.0
        %715 = vmatpush1.msra.mxu0 0.0
        %716 = vmatprep.mubr.f32.mxu0 0.0
        %717 = vmatmul.mubr.f32.gmra.mrb[0].mxu0 %v650
        %v718 = vpop.f32.mrb[0].mxu0
        %v719 = vadd.f32 %v646, %v718
        %v720 = vpop.f32.mrb[0].mxu0
        %721 = vdwg.mxu0
        %s722 = scalar_lea.vmem %s3, 16
        %v723 = vld [vmem:[%s722] sm:$0xff]
        %724 = vrot.lane.b32.xlu0 %v567, 126
        %v725 = vpop.permute.xlu0 %724
        %v728 = vsel %vm575, %v723, 0
        %730 = vmatprep.subr.mxu0 0.0
        %731 = vmatpush1.msra.mxu0 %v725
        %732 = vmatprep.subr.mxu0 0.0
        %733 = vmatpush1.msra.mxu0 0.0
        %734 = vmatprep.subr.mxu0 0.0
        %735 = vmatpush1.msra.mxu0 0.0
        %736 = vmatprep.subr.mxu0 0.0
        %737 = vmatpush1.msra.mxu0 0.0
        %738 = vmatprep.subr.mxu0 0.0
        %739 = vmatpush1.msra.mxu0 0.0
        %740 = vmatprep.subr.mxu0 0.0
        %741 = vmatpush1.msra.mxu0 0.0
        %742 = vmatprep.subr.mxu0 0.0
        %743 = vmatpush1.msra.mxu0 0.0
        %744 = vmatprep.subr.mxu0 0.0
        %745 = vmatpush1.msra.mxu0 0.0
        %746 = vmatprep.subr.mxu0 0.0
        %747 = vmatpush1.msra.mxu0 0.0
        %748 = vmatprep.subr.mxu0 0.0
        %749 = vmatpush1.msra.mxu0 0.0
        %750 = vmatprep.subr.mxu0 0.0
        %751 = vmatpush1.msra.mxu0 0.0
        %752 = vmatprep.subr.mxu0 0.0
        %753 = vmatpush1.msra.mxu0 0.0
        %754 = vmatprep.subr.mxu0 0.0
        %755 = vmatpush1.msra.mxu0 0.0
        %756 = vmatprep.subr.mxu0 0.0
        %757 = vmatpush1.msra.mxu0 0.0
        %758 = vmatprep.subr.mxu0 0.0
        %759 = vmatpush1.msra.mxu0 0.0
        %760 = vmatprep.subr.mxu0 0.0
        %761 = vmatpush1.msra.mxu0 0.0
        %762 = vmatprep.subr.mxu0 0.0
        %763 = vmatpush1.msra.mxu0 0.0
        %764 = vmatprep.subr.mxu0 0.0
        %765 = vmatpush1.msra.mxu0 0.0
        %766 = vmatprep.subr.mxu0 0.0
        %767 = vmatpush1.msra.mxu0 0.0
        %768 = vmatprep.subr.mxu0 0.0
        %769 = vmatpush1.msra.mxu0 0.0
        %770 = vmatprep.subr.mxu0 0.0
        %771 = vmatpush1.msra.mxu0 0.0
        %772 = vmatprep.subr.mxu0 0.0
        %773 = vmatpush1.msra.mxu0 0.0
        %774 = vmatprep.subr.mxu0 0.0
        %775 = vmatpush1.msra.mxu0 0.0
        %776 = vmatprep.subr.mxu0 0.0
        %777 = vmatpush1.msra.mxu0 0.0
        %778 = vmatprep.subr.mxu0 0.0
        %779 = vmatpush1.msra.mxu0 0.0
        %780 = vmatprep.subr.mxu0 0.0
        %781 = vmatpush1.msra.mxu0 0.0
        %782 = vmatprep.subr.mxu0 0.0
        %783 = vmatpush1.msra.mxu0 0.0
        %784 = vmatprep.subr.mxu0 0.0
        %785 = vmatpush1.msra.mxu0 0.0
        %786 = vmatprep.subr.mxu0 0.0
        %787 = vmatpush1.msra.mxu0 0.0
        %788 = vmatprep.subr.mxu0 0.0
        %789 = vmatpush1.msra.mxu0 0.0
        %790 = vmatprep.subr.mxu0 0.0
        %791 = vmatpush1.msra.mxu0 0.0
        %792 = vmatprep.subr.mxu0 0.0
        %793 = vmatpush1.msra.mxu0 0.0
        %794 = vmatprep.mubr.f32.mxu0 0.0
        %795 = vmatmul.mubr.f32.gmra.mrb[0].mxu0 %v728
        %v796 = vpop.f32.mrb[0].mxu0
        %v797 = vadd.f32 0.0, %v796
        %v798 = vpop.f32.mrb[0].mxu0
        %799 = vdwg.mxu0
        %v800 = vadd.f32 %v719, %v797
        %v801 = vld [vmem:[%s4] sm:$0xff]
        %803 = vset.pattern.permute.xlu0 0
        %804 = vperm.xlu0 %803, %v801
        %v805 = vpop.permute.xlu0 %804
        %v807 = vadd.f32 %v800, %v805
        %v808 = vmax.f32 %v807, 0.0
        %v809 = vld [vmem:[%s5] sm:$0xff]
        %v810 = vld [vmem:[%s6] sm:$0xff]
        %812 = vset.pattern.permute.xlu0 0
        %813 = vperm.xlu0 %812, %v810
        %v814 = vpop.permute.xlu0 %813
        %v817 = vsel %vm321, %v809, 0
        %v819 = vsel %vm325, %v307, 0
        %821 = vmatprep.subr.mxu0 0.0
        %822 = vmatpush1.msra.mxu0 %v819
        %823 = vmatprep.subr.mxu0 0.0
        %824 = vmatpush1.msra.mxu0 0.0
        %825 = vmatprep.subr.mxu0 0.0
        %826 = vmatpush1.msra.mxu0 0.0
        %827 = vmatprep.subr.mxu0 0.0
        %828 = vmatpush1.msra.mxu0 0.0
        %829 = vmatprep.subr.mxu0 0.0
        %830 = vmatpush1.msra.mxu0 0.0
        %831 = vmatprep.subr.mxu0 0.0
        %832 = vmatpush1.msra.mxu0 0.0
        %833 = vmatprep.subr.mxu0 0.0
        %834 = vmatpush1.msra.mxu0 0.0
        %835 = vmatprep.subr.mxu0 0.0
        %836 = vmatpush1.msra.mxu0 0.0
        %837 = vmatprep.subr.mxu0 0.0
        %838 = vmatpush1.msra.mxu0 0.0
        %839 = vmatprep.subr.mxu0 0.0
        %840 = vmatpush1.msra.mxu0 0.0
        %841 = vmatprep.subr.mxu0 0.0
        %842 = vmatpush1.msra.mxu0 0.0
        %843 = vmatprep.subr.mxu0 0.0
        %844 = vmatpush1.msra.mxu0 0.0
        %845 = vmatprep.subr.mxu0 0.0
        %846 = vmatpush1.msra.mxu0 0.0
        %847 = vmatprep.subr.mxu0 0.0
        %848 = vmatpush1.msra.mxu0 0.0
        %849 = vmatprep.subr.mxu0 0.0
        %850 = vmatpush1.msra.mxu0 0.0
        %851 = vmatprep.subr.mxu0 0.0
        %852 = vmatpush1.msra.mxu0 0.0
        %853 = vmatprep.subr.mxu0 0.0
        %854 = vmatpush1.msra.mxu0 0.0
        %855 = vmatprep.subr.mxu0 0.0
        %856 = vmatpush1.msra.mxu0 0.0
        %857 = vmatprep.subr.mxu0 0.0
        %858 = vmatpush1.msra.mxu0 0.0
        %859 = vmatprep.subr.mxu0 0.0
        %860 = vmatpush1.msra.mxu0 0.0
        %861 = vmatprep.subr.mxu0 0.0
        %862 = vmatpush1.msra.mxu0 0.0
        %863 = vmatprep.subr.mxu0 0.0
        %864 = vmatpush1.msra.mxu0 0.0
        %865 = vmatprep.subr.mxu0 0.0
        %866 = vmatpush1.msra.mxu0 0.0
        %867 = vmatprep.subr.mxu0 0.0
        %868 = vmatpush1.msra.mxu0 0.0
        %869 = vmatprep.subr.mxu0 0.0
        %870 = vmatpush1.msra.mxu0 0.0
        %871 = vmatprep.subr.mxu0 0.0
        %872 = vmatpush1.msra.mxu0 0.0
        %873 = vmatprep.subr.mxu0 0.0
        %874 = vmatpush1.msra.mxu0 0.0
        %875 = vmatprep.subr.mxu0 0.0
        %876 = vmatpush1.msra.mxu0 0.0
        %877 = vmatprep.subr.mxu0 0.0
        %878 = vmatpush1.msra.mxu0 0.0
        %879 = vmatprep.subr.mxu0 0.0
        %880 = vmatpush1.msra.mxu0 0.0
        %881 = vmatprep.subr.mxu0 0.0
        %882 = vmatpush1.msra.mxu0 0.0
        %883 = vmatprep.subr.mxu0 0.0
        %884 = vmatpush1.msra.mxu0 0.0
        %885 = vmatprep.mubr.f32.mxu0 0.0
        %886 = vmatmul.mubr.f32.gmra.mrb[0].mxu0 %v817
        %v887 = vpop.f32.mrb[0].mxu0
        %v888 = vadd.f32 %v814, %v887
        %v889 = vpop.f32.mrb[0].mxu0
        %890 = vdwg.mxu0
        %v891 = vadd.f32 %v808, %v888
        %v892 = vmax.f32 %v891, 0.0
        %vm893 = vcmask 130048
        %894 = vst.msk [vmem:[%s291] sm:$0xff] %vm893, %v892
        %s895 = sadd.s32 %s26, 1
        %p896 = scmp.lt.s32.totalorder %s895, 1
        // Predicated region
        $region53: #{tpu_custom_call.1} parent=47 // pred_check
          %p897 = pneg %p896
        $region54: #{tpu_custom_call.1} parent=47 // pred_check_branch
          %899 = sbr.rel (%p897) target = $region56
        $region55: #{tpu_custom_call.1} parent=47 // pred_region
          %900 = vrot.lane.b32.xlu0 %v307, 114
          %v901 = vpop.permute.xlu0 %900
          %vm903 = vcmask 11264
          %904 = vst.msk [vmem:[#allocation2] sm:$0xf] %vm903, %v901
          %905 = vrot.lane.b32.xlu0 %v560, 114
          %v906 = vpop.permute.xlu0 %905
          %vm908 = vcmask 15360
          %909 = vst.msk [vmem:[#allocation3] sm:$0xff] %vm908, %v906
        $region56: #{tpu_custom_call.1} parent=47 // pred_fallthru
          _
        %s910 = sand.u32 %s197, 1
        %s911 = scalar_lea.sflag [#allocation5], %s910
        %s912 = sand.u32 %s197, 1
        %s913 = smul.addr %s912, 8
        %s914 = scalar_lea.vmem [#allocation4], %s913
        // Predicated region
        $region57: #{tpu_custom_call.1} parent=47 // pred_check
          %p915 = pneg %p207
        $region58: #{tpu_custom_call.1} parent=47 // pred_check_branch
          %917 = sbr.rel (%p915) target = $region60
        $region59: #{tpu_custom_call.1} parent=47 // pred_region
          %s919 = ssub.s32 128, 128
          %920 = vsyncadd %s911, %s919
          %s921 = sadd.s32 %s26, %s25
          %s922 = smul.addr %s921, 128
          %s923 = scalar_lea.hbm %s7, %s922
          %s925 = sshll.u32 %s914, 4
          %s926 = int_to_ptr.vmem [resolvable:$true] %s925
          %928 = dma.vmem_to_hbm [thread:$0]  %s926, 128, %s923, %s911
        $region60: #{tpu_custom_call.1} parent=47 // pred_fallthru
          _
      $region48: #{tpu_custom_call.1} parent=5 // pred_fallthru
        _
      %p929 = scmp.le.s32.totalorder 2, %s16
      // Predicated region
      $region61: #{tpu_custom_call.1} parent=5 // pred_check
        %p930 = pneg %p929
      $region62: #{tpu_custom_call.1} parent=5 // pred_check_branch
        %932 = sbr.rel (%p930) target = $region64
      $region63: #{tpu_custom_call.1} parent=5 // pred_region
        %s933 = ssub.s32 %s16, 2
        // Predicated region
        $region65: #{tpu_custom_call.1} parent=63 // pred_check
          %p934 = pneg %p213
        $region66: #{tpu_custom_call.1} parent=63 // pred_check_branch
          %936 = sbr.rel (%p934) target = $region68
        $region67: #{tpu_custom_call.1} parent=63 // pred_region
          %s937 = sand.u32 %s198, 1
          %s938 = scalar_lea.sflag [#allocation5], %s937
          %s939 = sand.u32 %s198, 1
          %s940 = smul.addr %s939, 8
          %s941 = scalar_lea.vmem [#allocation4], %s940
          %942 = dma.done %s938, 128
        $region68: #{tpu_custom_call.1} parent=63 // pred_fallthru
          _
      $region64: #{tpu_custom_call.1} parent=5 // pred_fallthru
        _
    $region6: #{tpu_custom_call.1} parent=1 // loop_footer
      %s20 = sadd.s32 1, %s16
    $region7: #{tpu_custom_call.1} parent=1 // loop_footer_branch
      %15 = sbr.rel target = $region3
    $region8: #{tpu_custom_call.1} parent=1 // loop_exit
      _
    %943 = vsyncpa [#allocation5], 1
    %s944 = scalar_lea.sflag [#allocation5], 1
    %945 = vsyncpa %s944, 1

</llo_original>
